<compile_context>
chip_gen: v5e
topology: v5e:2x2
jax: 0.10.0
libtpu: 0.0.40
codegen_flags: <defaults>
</compile_context>

<pallas_src>
import functools

import jax
import jax.numpy as jnp
from jax.experimental import pallas as pl
from jax.experimental.pallas import tpu as pltpu


def _round_up(x, m):
    return -(-x // m) * m


# ----------------------------- Pallas kernel ---------------------------------

def _rnn_chunk_kernel(x_ref, h0_ref, w1x_ref, w1h_ref, b1_ref, w2_ref, b2_ref,
                      out_ref, hid_ref, h_scratch, *,
                      seq_len, mask_tail, compute_dtype):
    """One grid step == one chunk of Tc timesteps (whole sequence if it fits)."""
    c = pl.program_id(0)

    # Initialize the VMEM-resident hidden carry on the first chunk.
    @pl.when(c == 0)
    def _():
        h_scratch[...] = h0_ref[...]

    Bp, H = h0_ref.shape
    O = w2_ref.shape[1]
    Tc = x_ref.shape[0] // Bp
    f32 = jnp.dtype(compute_dtype) == jnp.dtype(jnp.float32)

    # ---- loop-invariant loads (weights already pre-cast in the wrapper) -----
    w1h = w1h_ref[...]                               # (H, H+O)
    w2 = w2_ref[...]                                 # (H+O, O)
    b2 = jnp.broadcast_to(b2_ref[...], (Bp, O))      # hoisted broadcast

    # ---- recurrence-independent input projection, batched over the chunk ----
    # One MXU pass with M = Tc*Bp rows instead of Tc tiny per-step matmuls.
    # xproj row (t*Bp + b) == [i2h|i2o] contribution of [category|input]_t,b.
    xproj = (jnp.dot(x_ref[...], w1x_ref[...],
                     preferred_element_type=jnp.float32)
             + b1_ref[...])                          # (Tc*Bp, H+O), f32

    h = h_scratch[...]                               # (Bp, H) f32 carry

    # ---- sequential recurrence: static unroll => static slab column offsets -
    for t in range(Tc):
        hm = h if f32 else h.astype(compute_dtype)
        # fused == cat(hidden', i2o(combined))  — exactly the o2o input.
        fused = xproj[t * Bp:(t + 1) * Bp] + jnp.dot(
            hm, w1h, preferred_element_type=jnp.float32)       # (Bp, H+O) f32
        h_new = fused[:, :H]                                   # hidden'
        fm = fused if f32 else fused.astype(compute_dtype)
        logits = jnp.dot(fm, w2, preferred_element_type=jnp.float32) + b2

        # Dropout(p=0.1): module evaluated in inference mode -> identity.
        # TODO(synk): training-mode dropout would need pltpu.prng_seed /
        # prng_random_bits and cannot reproduce torch's RNG stream.

        # LogSoftmax along dim=1 (numerically stable, f32).
        m = jnp.max(logits, axis=1, keepdims=True)
        lse = m + jnp.log(jnp.sum(jnp.exp(logits - m), axis=1, keepdims=True))
        out_ref[:, t * O:(t + 1) * O] = logits - lse           # lane-dense slab

        if mask_tail:
            # Only traced when T was padded up to a chunk multiple: padded tail
            # steps must not advance the hidden carry.
            h = jnp.where(c * Tc + t < seq_len, h_new, h)
        else:
            h = h_new

    h_scratch[...] = h                               # carry to next chunk

    @pl.when(c == pl.num_programs(0) - 1)
    def _():
        hid_ref[...] = h


# ----------------------------- host-side wrappers -----------------------------

def prepare_fused_params(params, n_categories, input_size, *,
                         compute_dtype=jnp.float32):
    """One-time weight fusion/splitting + pre-cast (done at init, NOT per call)."""
    ci = n_categories + input_size
    cdt = jnp.dtype(compute_dtype)
    w1 = jnp.concatenate([params["w_i2h"], params["w_i2o"]], axis=1)  # (C, H+O)
    b1 = jnp.concatenate([params["b_i2h"], params["b_i2o"]], axis=1)  # (1, H+O)
    return dict(
        w1x=w1[:ci].astype(cdt),          # multiplies streamed [category|input]
        w1h=w1[ci:].astype(cdt),          # multiplies the VMEM-resident hidden
        b1=b1.astype(jnp.float32),        # biases stay f32 (f32 accumulation)
        w2=params["w_o2o"].astype(cdt),   # (H+O, O)
        b2=params["b_o2o"].astype(jnp.float32),
    )


def rnn_sequence_forward(category_seq, input_seq, hidden0, fused_params, *,
                         compute_dtype=jnp.float32, max_chunk_steps=64):
    """Run T RNN steps with a time-chunked Pallas kernel.

    category_seq: (T, B, n_categories), input_seq: (T, B, input_size),
    hidden0: (B, H).  Returns (outputs (T, B, O), final hidden (B, H)).
    """
    T, B, _ = input_seq.shape
    H = fused_params["w1h"].shape[0]
    O = fused_params["w2"].shape[1]
    ci = fused_params["w1x"].shape[0]
    cdt = jnp.dtype(compute_dtype)

    # Batch padding: full f32 sublanes (8); full packed bf16 sublanes (16).
    b_mult = 16 if cdt == jnp.dtype(jnp.bfloat16) else 8
    Bp = max(b_mult, _round_up(B, b_mult))

    # Time chunking: whole sequence in one grid step when it fits; otherwise
    # chunks of `max_chunk_steps` (multiple of 8 so Tc*O is lane-dense, O=16).
    if T <= max_chunk_steps:
        Tc = T
    else:
        Tc = _round_up(max_chunk_steps, 8)
    Tp = _round_up(T, Tc)
    n_chunks = Tp // Tc
    mask_tail = (Tp != T)

    # One concat for the whole sequence; hidden joins inside the kernel.
    x = jnp.concatenate([category_seq, input_seq], axis=-1)        # (T, B, ci)
    x = jnp.pad(x, ((0, Tp - T), (0, Bp - B), (0, 0)))
    h0 = jnp.pad(hidden0, ((0, Bp - B), (0, 0))).astype(jnp.float32)

    # Flatten time into rows (row = t*Bp + b) so the in-kernel projection is a
    # single batched matmul; pre-cast streamed inputs + weights once, here.
    x2d = x.reshape(Tp * Bp, ci).astype(cdt)
    w1x = fused_params["w1x"].astype(cdt)
    w1h = fused_params["w1h"].astype(cdt)
    w2 = fused_params["w2"].astype(cdt)
    b1 = fused_params["b1"].astype(jnp.float32)
    b2 = fused_params["b2"].astype(jnp.float32)

    kernel = functools.partial(_rnn_chunk_kernel, seq_len=T,
                               mask_tail=mask_tail, compute_dtype=cdt)

    out_slab, hid = pl.pallas_call(
        kernel,
        out_shape=(
            jax.ShapeDtypeStruct((Bp, Tp * O), jnp.float32),   # lane-dense slab
            jax.ShapeDtypeStruct((Bp, H), jnp.float32),        # final hidden
        ),
        grid=(n_chunks,),
        in_specs=[
            pl.BlockSpec((Tc * Bp, ci), lambda c: (c, 0)),     # streamed chunk
            pl.BlockSpec((Bp, H), lambda c: (0, 0)),           # h0 (resident)
            pl.BlockSpec((ci, H + O), lambda c: (0, 0)),       # weights: constant
            pl.BlockSpec((H, H + O), lambda c: (0, 0)),        #   index maps =>
            pl.BlockSpec((1, H + O), lambda c: (0, 0)),        #   DMA'd once,
            pl.BlockSpec((H + O, O), lambda c: (0, 0)),        #   VMEM-resident
            pl.BlockSpec((1, O), lambda c: (0, 0)),
        ],
        out_specs=(
            pl.BlockSpec((Bp, Tc * O), lambda c: (0, c)),      # per-chunk slab
            pl.BlockSpec((Bp, H), lambda c: (0, 0)),           # final hidden
        ),
        scratch_shapes=[pltpu.VMEM((Bp, H), jnp.float32)],     # hidden carry
        compiler_params=pltpu.CompilerParams(
            # Time (chunk) axis is a true sequential dependency.
            # TODO(synk): on v7x, add a leading "parallel" batch-tile axis when
            # B is large enough to occupy the second TensorCore.
            dimension_semantics=("arbitrary",)),
    )(x2d, h0, w1x, w1h, b1, w2, b2)

    # (Bp, Tp*O) lane-dense slab -> (T, B, O)
    out = out_slab.reshape(Bp, Tp, O).transpose(1, 0, 2)[:T, :B, :]
    return out, hid[:B]


def rnn_forward(category, inp, hidden, fused_params, **kw):
    """Single-step API matching the PyTorch module's forward signature."""
    out, hid = rnn_sequence_forward(category[None], inp[None], hidden,
                                    fused_params, **kw)
    return out[0], hid


def init_params(key, n_categories, input_size, hidden_size, output_size):
    """Deterministic init mimicking nn.Linear's U(-1/sqrt(fan_in), +1/sqrt(fan_in)).

    Weights are stored transposed ([in, out]) so y = x @ W + b.
    """
    def linear(k, fan_in, fan_out):
        kw, kb = jax.random.split(k)
        bound = 1.0 / jnp.sqrt(fan_in)
        w = jax.random.uniform(kw, (fan_in, fan_out), jnp.float32, -bound, bound)
        b = jax.random.uniform(kb, (1, fan_out), jnp.float32, -bound, bound)
        return w, b

    comb = n_categories + input_size + hidden_size
    k1, k2, k3 = jax.random.split(key, 3)
    w_i2h, b_i2h = linear(k1, comb, hidden_size)
    w_i2o, b_i2o = linear(k2, comb, output_size)
    w_o2o, b_o2o = linear(k3, hidden_size + output_size, output_size)
    return dict(w_i2h=w_i2h, b_i2h=b_i2h,
                w_i2o=w_i2o, b_i2o=b_i2o,
                w_o2o=w_o2o, b_o2o=b_o2o)


# ----------------------------- pure-JAX reference -----------------------------

def rnn_reference_step(category, inp, hidden, params):
    combined = jnp.concatenate([category, inp, hidden], axis=1)
    h = combined @ params["w_i2h"] + params["b_i2h"]
    o = combined @ params["w_i2o"] + params["b_i2o"]
    oc = jnp.concatenate([h, o], axis=1)
    o = oc @ params["w_o2o"] + params["b_o2o"]
    o = jax.nn.log_softmax(o, axis=1)
    return o, h


def rnn_reference_sequence(category_seq, input_seq, hidden0, params):
    def step(h, ci):
        c, i = ci
        o, h_new = rnn_reference_step(c, i, h, params)
        return h_new, o
    h_final, outs = jax.lax.scan(step, hidden0, (category_seq, input_seq))
    return outs, h_final


if __name__ == "__main__":
    T = 8
    B = 2
    n_categories = 4
    input_size = 8
    hidden_size = 32
    output_size = 16

    key = jax.random.PRNGKey(0)
    kp, kc, ki = jax.random.split(key, 3)

    params = init_params(kp, n_categories, input_size, hidden_size, output_size)
    fused = prepare_fused_params(params, n_categories, input_size)

    category_seq = jax.random.normal(kc, (T, B, n_categories), jnp.float32)
    input_seq = jax.random.normal(ki, (T, B, input_size), jnp.float32)
    hidden0 = jnp.zeros((B, hidden_size), jnp.float32)   # initHidden()

    # Sequence-fused kernel (f32 compute) vs. pure-JAX scan reference.
    out_seq, hid_final = jax.block_until_ready(
        rnn_sequence_forward(category_seq, input_seq, hidden0, fused))
    ref_out, ref_hid = rnn_reference_sequence(category_seq, input_seq,
                                              hidden0, params)
    assert out_seq.shape == (T, B, output_size)
    assert hid_final.shape == (B, hidden_size)
    assert jnp.allclose(out_seq, ref_out, atol=1e-5, rtol=1e-5)
    assert jnp.allclose(hid_final, ref_hid, atol=1e-5, rtol=1e-5)

    # Single-step API (matches the module's forward(category, input, hidden)).
    out1, hid1 = jax.block_until_ready(
        rnn_forward(category_seq[0], input_seq[0], hidden0, fused))
    r_out1, r_hid1 = rnn_reference_step(category_seq[0], input_seq[0],
                                        hidden0, params)
    assert jnp.allclose(out1, r_out1, atol=1e-5, rtol=1e-5)
    assert jnp.allclose(hid1, r_hid1, atol=1e-5, rtol=1e-5)

    # bf16 compute path (v6e/v7x MXU) — pre-cast weights, f32 accumulation,
    # looser tolerance.  Keep the default f32 path on v5e.
    fused_bf16 = prepare_fused_params(params, n_categories, input_size,
                                      compute_dtype=jnp.bfloat16)
    out_bf, hid_bf = jax.block_until_ready(
        rnn_sequence_forward(category_seq, input_seq, hidden0, fused_bf16,
                             compute_dtype=jnp.bfloat16))
    assert jnp.allclose(out_bf, ref_out, atol=1e-1, rtol=0.0)

    print("KERNEL_OK")
</pallas_src>

<mosaic_0001>
module attributes {stable_mosaic.version = 11 : i64} {
  func.func @_rnn_chunk_kernel(%arg0: i32, %arg1: memref<64x12xf32, #tpu.memory_space<vmem>>, %arg2: memref<8x32xf32, #tpu.memory_space<vmem>>, %arg3: memref<12x48xf32, #tpu.memory_space<vmem>>, %arg4: memref<32x48xf32, #tpu.memory_space<vmem>>, %arg5: memref<1x48xf32, #tpu.memory_space<vmem>>, %arg6: memref<48x16xf32, #tpu.memory_space<vmem>>, %arg7: memref<1x16xf32, #tpu.memory_space<vmem>>, %arg8: memref<8x128xf32, #tpu.memory_space<vmem>>, %arg9: memref<8x32xf32, #tpu.memory_space<vmem>>, %arg10: memref<8x32xf32, #tpu.memory_space<vmem>>) attributes {dimension_semantics = [#tpu.dimension_semantics<arbitrary>], iteration_bounds = array<i64: 1>, scalar_prefetch = 0 : i64, scratch_operands = 1 : i64, tpu.core_type = #tpu.core_type<tc>, window_params = [{transform_indices = @transform_0, window_bounds = array<i64: 64, 12>}, {pipeline_mode = #tpu.pipeline_mode<synchronous>, transform_indices = @transform_1, window_bounds = array<i64: 8, 32>}, {pipeline_mode = #tpu.pipeline_mode<synchronous>, transform_indices = @transform_2, window_bounds = array<i64: 12, 48>}, {pipeline_mode = #tpu.pipeline_mode<synchronous>, transform_indices = @transform_3, window_bounds = array<i64: 32, 48>}, {pipeline_mode = #tpu.pipeline_mode<synchronous>, transform_indices = @transform_4, window_bounds = array<i64: 1, 48>}, {pipeline_mode = #tpu.pipeline_mode<synchronous>, transform_indices = @transform_5, window_bounds = array<i64: 48, 16>}, {pipeline_mode = #tpu.pipeline_mode<synchronous>, transform_indices = @transform_6, window_bounds = array<i64: 1, 16>}, {transform_indices = @transform_7, window_bounds = array<i64: 8, 128>}, {pipeline_mode = #tpu.pipeline_mode<synchronous>, transform_indices = @transform_8, window_bounds = array<i64: 8, 32>}]} {
    %c0_i32 = arith.constant 0 : i32
    %0 = arith.cmpi eq, %arg0, %c0_i32 : i32
    %1 = arith.extui %0 : i1 to i32
    %c0_i32_0 = arith.constant 0 : i32
    %2 = arith.cmpi ne, %1, %c0_i32_0 : i32
    scf.if %2 {
      %c0_59 = arith.constant 0 : index
      %c0_60 = arith.constant 0 : index
      %163 = vector.load %arg2[%c0_59, %c0_60] : memref<8x32xf32, #tpu.memory_space<vmem>>, vector<8x32xf32>
      %c0_61 = arith.constant 0 : index
      %c0_62 = arith.constant 0 : index
      %164 = vector.load %arg10[%c0_61, %c0_62] : memref<8x32xf32, #tpu.memory_space<vmem>>, vector<8x32xf32>
      tpu.vector_store %arg10[%c0_61, %c0_62], %163 {strides = array<i32>} : memref<8x32xf32, #tpu.memory_space<vmem>>, vector<8x32xf32>,
    } else {
    }
    %c0 = arith.constant 0 : index
    %c0_1 = arith.constant 0 : index
    %3 = vector.load %arg4[%c0, %c0_1] : memref<32x48xf32, #tpu.memory_space<vmem>>, vector<32x48xf32>
    %c0_2 = arith.constant 0 : index
    %c0_3 = arith.constant 0 : index
    %4 = vector.load %arg6[%c0_2, %c0_3] : memref<48x16xf32, #tpu.memory_space<vmem>>, vector<48x16xf32>
    %c0_4 = arith.constant 0 : index
    %c0_5 = arith.constant 0 : index
    %5 = vector.load %arg7[%c0_4, %c0_5] : memref<1x16xf32, #tpu.memory_space<vmem>>, vector<1x16xf32>
    %6 = vector.shape_cast %5 : vector<1x16xf32> to vector<1x16xf32>
    %7 = vector.broadcast %6 : vector<1x16xf32> to vector<8x16xf32>
    %c0_6 = arith.constant 0 : index
    %c0_7 = arith.constant 0 : index
    %8 = vector.load %arg1[%c0_6, %c0_7] : memref<64x12xf32, #tpu.memory_space<vmem>>, vector<64x12xf32>
    %c0_8 = arith.constant 0 : index
    %c0_9 = arith.constant 0 : index
    %9 = vector.load %arg3[%c0_8, %c0_9] : memref<12x48xf32, #tpu.memory_space<vmem>>, vector<12x48xf32>
    %cst = arith.constant dense<0.000000e+00> : vector<64x48xf32>
    %10 = tpu.matmul %8, %9, %cst {dimension_numbers = #tpu.dot_dimension_numbers<[1], [0], [0], [1], [0, 0, 1, 1], [], []>} : vector<64x12xf32>, vector<12x48xf32>, vector<64x48xf32> -> vector<64x48xf32>
    %c0_10 = arith.constant 0 : index
    %c0_11 = arith.constant 0 : index
    %11 = vector.load %arg5[%c0_10, %c0_11] : memref<1x48xf32, #tpu.memory_space<vmem>>, vector<1x48xf32>
    %12 = vector.broadcast %11 : vector<1x48xf32> to vector<64x48xf32>
    %13 = arith.addf %10, %12 : vector<64x48xf32>
    %c0_12 = arith.constant 0 : index
    %c0_13 = arith.constant 0 : index
    %14 = vector.load %arg10[%c0_12, %c0_13] : memref<8x32xf32, #tpu.memory_space<vmem>>, vector<8x32xf32>
    %15 = vector.extract_strided_slice %13 {offsets = [0, 0], sizes = [8, 48], strides = [1, 1]} : vector<64x48xf32> to vector<8x48xf32>
    %cst_14 = arith.constant dense<0.000000e+00> : vector<8x48xf32>
    %16 = tpu.matmul %14, %3, %cst_14 {dimension_numbers = #tpu.dot_dimension_numbers<[1], [0], [0], [1], [0, 0, 1, 1], [], []>} : vector<8x32xf32>, vector<32x48xf32>, vector<8x48xf32> -> vector<8x48xf32>
    %17 = arith.addf %15, %16 : vector<8x48xf32>
    %18 = vector.extract_strided_slice %17 {offsets = [0, 0], sizes = [8, 32], strides = [1, 1]} : vector<8x48xf32> to vector<8x32xf32>
    %cst_15 = arith.constant dense<0.000000e+00> : vector<8x16xf32>
    %19 = tpu.matmul %17, %4, %cst_15 {dimension_numbers = #tpu.dot_dimension_numbers<[1], [0], [0], [1], [0, 0, 1, 1], [], []>} : vector<8x48xf32>, vector<48x16xf32>, vector<8x16xf32> -> vector<8x16xf32>
    %20 = arith.addf %19, %7 : vector<8x16xf32>
    %cst_16 = arith.constant dense<0xFF800000> : vector<8xf32>
    %21 = vector.multi_reduction <maximumf>, %20, %cst_16 [1] : vector<8x16xf32> to vector<8xf32>
    %22 = vector.shape_cast %21 : vector<8xf32> to vector<8x1xf32>
    %23 = vector.broadcast %22 : vector<8x1xf32> to vector<8x16xf32>
    %24 = arith.subf %20, %23 : vector<8x16xf32>
    %25 = math.exp %24 : vector<8x16xf32>
    %cst_17 = arith.constant dense<0.000000e+00> : vector<8xf32>
    %26 = vector.multi_reduction <add>, %25, %cst_17 [1] : vector<8x16xf32> to vector<8xf32>
    %27 = vector.shape_cast %26 : vector<8xf32> to vector<8x1xf32>
    %28 = math.log %27 : vector<8x1xf32>
    %29 = arith.addf %22, %28 : vector<8x1xf32>
    %30 = vector.broadcast %29 : vector<8x1xf32> to vector<8x16xf32>
    %31 = arith.subf %20, %30 : vector<8x16xf32>
    %c0_18 = arith.constant 0 : index
    %c0_19 = arith.constant 0 : index
    %32 = vector.load %arg8[%c0_18, %c0_19] : memref<8x128xf32, #tpu.memory_space<vmem>>, vector<8x16xf32>
    tpu.vector_store %arg8[%c0_18, %c0_19], %31 {strides = array<i32>} : memref<8x128xf32, #tpu.memory_space<vmem>>, vector<8x16xf32>,
    %33 = vector.extract_strided_slice %13 {offsets = [8, 0], sizes = [8, 48], strides = [1, 1]} : vector<64x48xf32> to vector<8x48xf32>
    %cst_20 = arith.constant dense<0.000000e+00> : vector<8x48xf32>
    %34 = tpu.matmul %18, %3, %cst_20 {dimension_numbers = #tpu.dot_dimension_numbers<[1], [0], [0], [1], [0, 0, 1, 1], [], []>} : vector<8x32xf32>, vector<32x48xf32>, vector<8x48xf32> -> vector<8x48xf32>
    %35 = arith.addf %33, %34 : vector<8x48xf32>
    %36 = vector.extract_strided_slice %35 {offsets = [0, 0], sizes = [8, 32], strides = [1, 1]} : vector<8x48xf32> to vector<8x32xf32>
    %cst_21 = arith.constant dense<0.000000e+00> : vector<8x16xf32>
    %37 = tpu.matmul %35, %4, %cst_21 {dimension_numbers = #tpu.dot_dimension_numbers<[1], [0], [0], [1], [0, 0, 1, 1], [], []>} : vector<8x48xf32>, vector<48x16xf32>, vector<8x16xf32> -> vector<8x16xf32>
    %38 = arith.addf %37, %7 : vector<8x16xf32>
    %cst_22 = arith.constant dense<0xFF800000> : vector<8xf32>
    %39 = vector.multi_reduction <maximumf>, %38, %cst_22 [1] : vector<8x16xf32> to vector<8xf32>
    %40 = vector.shape_cast %39 : vector<8xf32> to vector<8x1xf32>
    %41 = vector.broadcast %40 : vector<8x1xf32> to vector<8x16xf32>
    %42 = arith.subf %38, %41 : vector<8x16xf32>
    %43 = math.exp %42 : vector<8x16xf32>
    %cst_23 = arith.constant dense<0.000000e+00> : vector<8xf32>
    %44 = vector.multi_reduction <add>, %43, %cst_23 [1] : vector<8x16xf32> to vector<8xf32>
    %45 = vector.shape_cast %44 : vector<8xf32> to vector<8x1xf32>
    %46 = math.log %45 : vector<8x1xf32>
    %47 = arith.addf %40, %46 : vector<8x1xf32>
    %48 = vector.broadcast %47 : vector<8x1xf32> to vector<8x16xf32>
    %49 = arith.subf %38, %48 : vector<8x16xf32>
    %c0_24 = arith.constant 0 : index
    %c16 = arith.constant 16 : index
    %50 = vector.load %arg8[%c0_24, %c16] : memref<8x128xf32, #tpu.memory_space<vmem>>, vector<8x16xf32>
    tpu.vector_store %arg8[%c0_24, %c16], %49 {strides = array<i32>} : memref<8x128xf32, #tpu.memory_space<vmem>>, vector<8x16xf32>,
    %51 = vector.extract_strided_slice %13 {offsets = [16, 0], sizes = [8, 48], strides = [1, 1]} : vector<64x48xf32> to vector<8x48xf32>
    %cst_25 = arith.constant dense<0.000000e+00> : vector<8x48xf32>
    %52 = tpu.matmul %36, %3, %cst_25 {dimension_numbers = #tpu.dot_dimension_numbers<[1], [0], [0], [1], [0, 0, 1, 1], [], []>} : vector<8x32xf32>, vector<32x48xf32>, vector<8x48xf32> -> vector<8x48xf32>
    %53 = arith.addf %51, %52 : vector<8x48xf32>
    %54 = vector.extract_strided_slice %53 {offsets = [0, 0], sizes = [8, 32], strides = [1, 1]} : vector<8x48xf32> to vector<8x32xf32>
    %cst_26 = arith.constant dense<0.000000e+00> : vector<8x16xf32>
    %55 = tpu.matmul %53, %4, %cst_26 {dimension_numbers = #tpu.dot_dimension_numbers<[1], [0], [0], [1], [0, 0, 1, 1], [], []>} : vector<8x48xf32>, vector<48x16xf32>, vector<8x16xf32> -> vector<8x16xf32>
    %56 = arith.addf %55, %7 : vector<8x16xf32>
    %cst_27 = arith.constant dense<0xFF800000> : vector<8xf32>
    %57 = vector.multi_reduction <maximumf>, %56, %cst_27 [1] : vector<8x16xf32> to vector<8xf32>
    %58 = vector.shape_cast %57 : vector<8xf32> to vector<8x1xf32>
    %59 = vector.broadcast %58 : vector<8x1xf32> to vector<8x16xf32>
    %60 = arith.subf %56, %59 : vector<8x16xf32>
    %61 = math.exp %60 : vector<8x16xf32>
    %cst_28 = arith.constant dense<0.000000e+00> : vector<8xf32>
    %62 = vector.multi_reduction <add>, %61, %cst_28 [1] : vector<8x16xf32> to vector<8xf32>
    %63 = vector.shape_cast %62 : vector<8xf32> to vector<8x1xf32>
    %64 = math.log %63 : vector<8x1xf32>
    %65 = arith.addf %58, %64 : vector<8x1xf32>
    %66 = vector.broadcast %65 : vector<8x1xf32> to vector<8x16xf32>
    %67 = arith.subf %56, %66 : vector<8x16xf32>
    %c0_29 = arith.constant 0 : index
    %c32 = arith.constant 32 : index
    %68 = vector.load %arg8[%c0_29, %c32] : memref<8x128xf32, #tpu.memory_space<vmem>>, vector<8x16xf32>
    tpu.vector_store %arg8[%c0_29, %c32], %67 {strides = array<i32>} : memref<8x128xf32, #tpu.memory_space<vmem>>, vector<8x16xf32>,
    %69 = vector.extract_strided_slice %13 {offsets = [24, 0], sizes = [8, 48], strides = [1, 1]} : vector<64x48xf32> to vector<8x48xf32>
    %cst_30 = arith.constant dense<0.000000e+00> : vector<8x48xf32>
    %70 = tpu.matmul %54, %3, %cst_30 {dimension_numbers = #tpu.dot_dimension_numbers<[1], [0], [0], [1], [0, 0, 1, 1], [], []>} : vector<8x32xf32>, vector<32x48xf32>, vector<8x48xf32> -> vector<8x48xf32>
    %71 = arith.addf %69, %70 : vector<8x48xf32>
    %72 = vector.extract_strided_slice %71 {offsets = [0, 0], sizes = [8, 32], strides = [1, 1]} : vector<8x48xf32> to vector<8x32xf32>
    %cst_31 = arith.constant dense<0.000000e+00> : vector<8x16xf32>
    %73 = tpu.matmul %71, %4, %cst_31 {dimension_numbers = #tpu.dot_dimension_numbers<[1], [0], [0], [1], [0, 0, 1, 1], [], []>} : vector<8x48xf32>, vector<48x16xf32>, vector<8x16xf32> -> vector<8x16xf32>
    %74 = arith.addf %73, %7 : vector<8x16xf32>
    %cst_32 = arith.constant dense<0xFF800000> : vector<8xf32>
    %75 = vector.multi_reduction <maximumf>, %74, %cst_32 [1] : vector<8x16xf32> to vector<8xf32>
    %76 = vector.shape_cast %75 : vector<8xf32> to vector<8x1xf32>
    %77 = vector.broadcast %76 : vector<8x1xf32> to vector<8x16xf32>
    %78 = arith.subf %74, %77 : vector<8x16xf32>
    %79 = math.exp %78 : vector<8x16xf32>
    %cst_33 = arith.constant dense<0.000000e+00> : vector<8xf32>
    %80 = vector.multi_reduction <add>, %79, %cst_33 [1] : vector<8x16xf32> to vector<8xf32>
    %81 = vector.shape_cast %80 : vector<8xf32> to vector<8x1xf32>
    %82 = math.log %81 : vector<8x1xf32>
    %83 = arith.addf %76, %82 : vector<8x1xf32>
    %84 = vector.broadcast %83 : vector<8x1xf32> to vector<8x16xf32>
    %85 = arith.subf %74, %84 : vector<8x16xf32>
    %c0_34 = arith.constant 0 : index
    %c48 = arith.constant 48 : index
    %86 = vector.load %arg8[%c0_34, %c48] : memref<8x128xf32, #tpu.memory_space<vmem>>, vector<8x16xf32>
    tpu.vector_store %arg8[%c0_34, %c48], %85 {strides = array<i32>} : memref<8x128xf32, #tpu.memory_space<vmem>>, vector<8x16xf32>,
    %87 = vector.extract_strided_slice %13 {offsets = [32, 0], sizes = [8, 48], strides = [1, 1]} : vector<64x48xf32> to vector<8x48xf32>
    %cst_35 = arith.constant dense<0.000000e+00> : vector<8x48xf32>
    %88 = tpu.matmul %72, %3, %cst_35 {dimension_numbers = #tpu.dot_dimension_numbers<[1], [0], [0], [1], [0, 0, 1, 1], [], []>} : vector<8x32xf32>, vector<32x48xf32>, vector<8x48xf32> -> vector<8x48xf32>
    %89 = arith.addf %87, %88 : vector<8x48xf32>
    %90 = vector.extract_strided_slice %89 {offsets = [0, 0], sizes = [8, 32], strides = [1, 1]} : vector<8x48xf32> to vector<8x32xf32>
    %cst_36 = arith.constant dense<0.000000e+00> : vector<8x16xf32>
    %91 = tpu.matmul %89, %4, %cst_36 {dimension_numbers = #tpu.dot_dimension_numbers<[1], [0], [0], [1], [0, 0, 1, 1], [], []>} : vector<8x48xf32>, vector<48x16xf32>, vector<8x16xf32> -> vector<8x16xf32>
    %92 = arith.addf %91, %7 : vector<8x16xf32>
    %cst_37 = arith.constant dense<0xFF800000> : vector<8xf32>
    %93 = vector.multi_reduction <maximumf>, %92, %cst_37 [1] : vector<8x16xf32> to vector<8xf32>
    %94 = vector.shape_cast %93 : vector<8xf32> to vector<8x1xf32>
    %95 = vector.broadcast %94 : vector<8x1xf32> to vector<8x16xf32>
    %96 = arith.subf %92, %95 : vector<8x16xf32>
    %97 = math.exp %96 : vector<8x16xf32>
    %cst_38 = arith.constant dense<0.000000e+00> : vector<8xf32>
    %98 = vector.multi_reduction <add>, %97, %cst_38 [1] : vector<8x16xf32> to vector<8xf32>
    %99 = vector.shape_cast %98 : vector<8xf32> to vector<8x1xf32>
    %100 = math.log %99 : vector<8x1xf32>
    %101 = arith.addf %94, %100 : vector<8x1xf32>
    %102 = vector.broadcast %101 : vector<8x1xf32> to vector<8x16xf32>
    %103 = arith.subf %92, %102 : vector<8x16xf32>
    %c0_39 = arith.constant 0 : index
    %c64 = arith.constant 64 : index
    %104 = vector.load %arg8[%c0_39, %c64] : memref<8x128xf32, #tpu.memory_space<vmem>>, vector<8x16xf32>
    tpu.vector_store %arg8[%c0_39, %c64], %103 {strides = array<i32>} : memref<8x128xf32, #tpu.memory_space<vmem>>, vector<8x16xf32>,
    %105 = vector.extract_strided_slice %13 {offsets = [40, 0], sizes = [8, 48], strides = [1, 1]} : vector<64x48xf32> to vector<8x48xf32>
    %cst_40 = arith.constant dense<0.000000e+00> : vector<8x48xf32>
    %106 = tpu.matmul %90, %3, %cst_40 {dimension_numbers = #tpu.dot_dimension_numbers<[1], [0], [0], [1], [0, 0, 1, 1], [], []>} : vector<8x32xf32>, vector<32x48xf32>, vector<8x48xf32> -> vector<8x48xf32>
    %107 = arith.addf %105, %106 : vector<8x48xf32>
    %108 = vector.extract_strided_slice %107 {offsets = [0, 0], sizes = [8, 32], strides = [1, 1]} : vector<8x48xf32> to vector<8x32xf32>
    %cst_41 = arith.constant dense<0.000000e+00> : vector<8x16xf32>
    %109 = tpu.matmul %107, %4, %cst_41 {dimension_numbers = #tpu.dot_dimension_numbers<[1], [0], [0], [1], [0, 0, 1, 1], [], []>} : vector<8x48xf32>, vector<48x16xf32>, vector<8x16xf32> -> vector<8x16xf32>
    %110 = arith.addf %109, %7 : vector<8x16xf32>
    %cst_42 = arith.constant dense<0xFF800000> : vector<8xf32>
    %111 = vector.multi_reduction <maximumf>, %110, %cst_42 [1] : vector<8x16xf32> to vector<8xf32>
    %112 = vector.shape_cast %111 : vector<8xf32> to vector<8x1xf32>
    %113 = vector.broadcast %112 : vector<8x1xf32> to vector<8x16xf32>
    %114 = arith.subf %110, %113 : vector<8x16xf32>
    %115 = math.exp %114 : vector<8x16xf32>
    %cst_43 = arith.constant dense<0.000000e+00> : vector<8xf32>
    %116 = vector.multi_reduction <add>, %115, %cst_43 [1] : vector<8x16xf32> to vector<8xf32>
    %117 = vector.shape_cast %116 : vector<8xf32> to vector<8x1xf32>
    %118 = math.log %117 : vector<8x1xf32>
    %119 = arith.addf %112, %118 : vector<8x1xf32>
    %120 = vector.broadcast %119 : vector<8x1xf32> to vector<8x16xf32>
    %121 = arith.subf %110, %120 : vector<8x16xf32>
    %c0_44 = arith.constant 0 : index
    %c80 = arith.constant 80 : index
    %122 = vector.load %arg8[%c0_44, %c80] : memref<8x128xf32, #tpu.memory_space<vmem>>, vector<8x16xf32>
    tpu.vector_store %arg8[%c0_44, %c80], %121 {strides = array<i32>} : memref<8x128xf32, #tpu.memory_space<vmem>>, vector<8x16xf32>,
    %123 = vector.extract_strided_slice %13 {offsets = [48, 0], sizes = [8, 48], strides = [1, 1]} : vector<64x48xf32> to vector<8x48xf32>
    %cst_45 = arith.constant dense<0.000000e+00> : vector<8x48xf32>
    %124 = tpu.matmul %108, %3, %cst_45 {dimension_numbers = #tpu.dot_dimension_numbers<[1], [0], [0], [1], [0, 0, 1, 1], [], []>} : vector<8x32xf32>, vector<32x48xf32>, vector<8x48xf32> -> vector<8x48xf32>
    %125 = arith.addf %123, %124 : vector<8x48xf32>
    %126 = vector.extract_strided_slice %125 {offsets = [0, 0], sizes = [8, 32], strides = [1, 1]} : vector<8x48xf32> to vector<8x32xf32>
    %cst_46 = arith.constant dense<0.000000e+00> : vector<8x16xf32>
    %127 = tpu.matmul %125, %4, %cst_46 {dimension_numbers = #tpu.dot_dimension_numbers<[1], [0], [0], [1], [0, 0, 1, 1], [], []>} : vector<8x48xf32>, vector<48x16xf32>, vector<8x16xf32> -> vector<8x16xf32>
    %128 = arith.addf %127, %7 : vector<8x16xf32>
    %cst_47 = arith.constant dense<0xFF800000> : vector<8xf32>
    %129 = vector.multi_reduction <maximumf>, %128, %cst_47 [1] : vector<8x16xf32> to vector<8xf32>
    %130 = vector.shape_cast %129 : vector<8xf32> to vector<8x1xf32>
    %131 = vector.broadcast %130 : vector<8x1xf32> to vector<8x16xf32>
    %132 = arith.subf %128, %131 : vector<8x16xf32>
    %133 = math.exp %132 : vector<8x16xf32>
    %cst_48 = arith.constant dense<0.000000e+00> : vector<8xf32>
    %134 = vector.multi_reduction <add>, %133, %cst_48 [1] : vector<8x16xf32> to vector<8xf32>
    %135 = vector.shape_cast %134 : vector<8xf32> to vector<8x1xf32>
    %136 = math.log %135 : vector<8x1xf32>
    %137 = arith.addf %130, %136 : vector<8x1xf32>
    %138 = vector.broadcast %137 : vector<8x1xf32> to vector<8x16xf32>
    %139 = arith.subf %128, %138 : vector<8x16xf32>
    %c0_49 = arith.constant 0 : index
    %c96 = arith.constant 96 : index
    %140 = vector.load %arg8[%c0_49, %c96] : memref<8x128xf32, #tpu.memory_space<vmem>>, vector<8x16xf32>
    tpu.vector_store %arg8[%c0_49, %c96], %139 {strides = array<i32>} : memref<8x128xf32, #tpu.memory_space<vmem>>, vector<8x16xf32>,
    %141 = vector.extract_strided_slice %13 {offsets = [56, 0], sizes = [8, 48], strides = [1, 1]} : vector<64x48xf32> to vector<8x48xf32>
    %cst_50 = arith.constant dense<0.000000e+00> : vector<8x48xf32>
    %142 = tpu.matmul %126, %3, %cst_50 {dimension_numbers = #tpu.dot_dimension_numbers<[1], [0], [0], [1], [0, 0, 1, 1], [], []>} : vector<8x32xf32>, vector<32x48xf32>, vector<8x48xf32> -> vector<8x48xf32>
    %143 = arith.addf %141, %142 : vector<8x48xf32>
    %144 = vector.extract_strided_slice %143 {offsets = [0, 0], sizes = [8, 32], strides = [1, 1]} : vector<8x48xf32> to vector<8x32xf32>
    %cst_51 = arith.constant dense<0.000000e+00> : vector<8x16xf32>
    %145 = tpu.matmul %143, %4, %cst_51 {dimension_numbers = #tpu.dot_dimension_numbers<[1], [0], [0], [1], [0, 0, 1, 1], [], []>} : vector<8x48xf32>, vector<48x16xf32>, vector<8x16xf32> -> vector<8x16xf32>
    %146 = arith.addf %145, %7 : vector<8x16xf32>
    %cst_52 = arith.constant dense<0xFF800000> : vector<8xf32>
    %147 = vector.multi_reduction <maximumf>, %146, %cst_52 [1] : vector<8x16xf32> to vector<8xf32>
    %148 = vector.shape_cast %147 : vector<8xf32> to vector<8x1xf32>
    %149 = vector.broadcast %148 : vector<8x1xf32> to vector<8x16xf32>
    %150 = arith.subf %146, %149 : vector<8x16xf32>
    %151 = math.exp %150 : vector<8x16xf32>
    %cst_53 = arith.constant dense<0.000000e+00> : vector<8xf32>
    %152 = vector.multi_reduction <add>, %151, %cst_53 [1] : vector<8x16xf32> to vector<8xf32>
    %153 = vector.shape_cast %152 : vector<8xf32> to vector<8x1xf32>
    %154 = math.log %153 : vector<8x1xf32>
    %155 = arith.addf %148, %154 : vector<8x1xf32>
    %156 = vector.broadcast %155 : vector<8x1xf32> to vector<8x16xf32>
    %157 = arith.subf %146, %156 : vector<8x16xf32>
    %c0_54 = arith.constant 0 : index
    %c112 = arith.constant 112 : index
    %158 = vector.load %arg8[%c0_54, %c112] : memref<8x128xf32, #tpu.memory_space<vmem>>, vector<8x16xf32>
    tpu.vector_store %arg8[%c0_54, %c112], %157 {strides = array<i32>} : memref<8x128xf32, #tpu.memory_space<vmem>>, vector<8x16xf32>,
    %c0_55 = arith.constant 0 : index
    %c0_56 = arith.constant 0 : index
    %159 = vector.load %arg10[%c0_55, %c0_56] : memref<8x32xf32, #tpu.memory_space<vmem>>, vector<8x32xf32>
    tpu.vector_store %arg10[%c0_55, %c0_56], %144 {strides = array<i32>} : memref<8x32xf32, #tpu.memory_space<vmem>>, vector<8x32xf32>,
    %c0_i32_57 = arith.constant 0 : i32
    %160 = arith.cmpi eq, %arg0, %c0_i32_57 : i32
    %161 = arith.extui %160 : i1 to i32
    %c0_i32_58 = arith.constant 0 : i32
    %162 = arith.cmpi ne, %161, %c0_i32_58 : i32
    scf.if %162 {
      %c0_59 = arith.constant 0 : index
      %c0_60 = arith.constant 0 : index
      %163 = vector.load %arg9[%c0_59, %c0_60] : memref<8x32xf32, #tpu.memory_space<vmem>>, vector<8x32xf32>
      tpu.vector_store %arg9[%c0_59, %c0_60], %144 {strides = array<i32>} : memref<8x32xf32, #tpu.memory_space<vmem>>, vector<8x32xf32>,
    } else {
    }
    return
  }
  func.func @transform_0(%arg0: i32) -> (i32, i32) {
    %c0_i32 = arith.constant 0 : i32
    %c0_i32_0 = arith.constant 0 : i32
    return %arg0, %c0_i32 : i32, i32
  }
  func.func @transform_1(%arg0: i32) -> (i32, i32) {
    %c0_i32 = arith.constant 0 : i32
    %c0_i32_0 = arith.constant 0 : i32
    %c0_i32_1 = arith.constant 0 : i32
    return %c0_i32, %c0_i32_0 : i32, i32
  }
  func.func @transform_2(%arg0: i32) -> (i32, i32) {
    %c0_i32 = arith.constant 0 : i32
    %c0_i32_0 = arith.constant 0 : i32
    %c0_i32_1 = arith.constant 0 : i32
    return %c0_i32, %c0_i32_0 : i32, i32
  }
  func.func @transform_3(%arg0: i32) -> (i32, i32) {
    %c0_i32 = arith.constant 0 : i32
    %c0_i32_0 = arith.constant 0 : i32
    %c0_i32_1 = arith.constant 0 : i32
    return %c0_i32, %c0_i32_0 : i32, i32
  }
  func.func @transform_4(%arg0: i32) -> (i32, i32) {
    %c0_i32 = arith.constant 0 : i32
    %c0_i32_0 = arith.constant 0 : i32
    %c0_i32_1 = arith.constant 0 : i32
    return %c0_i32, %c0_i32_0 : i32, i32
  }
  func.func @transform_5(%arg0: i32) -> (i32, i32) {
    %c0_i32 = arith.constant 0 : i32
    %c0_i32_0 = arith.constant 0 : i32
    %c0_i32_1 = arith.constant 0 : i32
    return %c0_i32, %c0_i32_0 : i32, i32
  }
  func.func @transform_6(%arg0: i32) -> (i32, i32) {
    %c0_i32 = arith.constant 0 : i32
    %c0_i32_0 = arith.constant 0 : i32
    %c0_i32_1 = arith.constant 0 : i32
    return %c0_i32, %c0_i32_0 : i32, i32
  }
  func.func @transform_7(%arg0: i32) -> (i32, i32) {
    %c0_i32 = arith.constant 0 : i32
    %c0_i32_0 = arith.constant 0 : i32
    return %c0_i32, %arg0 : i32, i32
  }
  func.func @transform_8(%arg0: i32) -> (i32, i32) {
    %c0_i32 = arith.constant 0 : i32
    %c0_i32_0 = arith.constant 0 : i32
    %c0_i32_1 = arith.constant 0 : i32
    return %c0_i32, %c0_i32_0 : i32, i32
  }
}

</mosaic_0001>

<llo_original>
// kernel: tpu_custom_call.1
$region0: #{tpu_custom_call.1}
  #allocation0 [shape = 'u32[]', space=smem, size = 0x4, offset = 0x4, fixed_abs, tag = 'smem constant byte address 0x4 - core index']
  #allocation1 [shape = 'u32[72,128]{1,0:T(1,128)}', space=vmem, size = 0x9000, scoped, tag = 'internal scratch']
  #allocation2 [shape = 'f32[8,32]{1,0:T(8,128)}', space=vmem, size = 0x1000, scoped, tag = 'scratch operand']
  %s0 = inlined_call_operand.vmem [shape: f32[64,12], index: 0, kind: input, shape index: {}]
  %s1 = inlined_call_operand.vmem [shape: f32[8,32], index: 1, kind: input, shape index: {}]
  %s2 = inlined_call_operand.vmem [shape: f32[12,48], index: 2, kind: input, shape index: {}]
  %s3 = inlined_call_operand.vmem [shape: f32[32,48], index: 3, kind: input, shape index: {}]
  %s4 = inlined_call_operand.vmem [shape: f32[1,48], index: 4, kind: input, shape index: {}]
  %s5 = inlined_call_operand.vmem [shape: f32[48,16], index: 5, kind: input, shape index: {}]
  %s6 = inlined_call_operand.vmem [shape: f32[1,16], index: 6, kind: input, shape index: {}]
  %s7 = inlined_call_operand.hbm [shape: f32[8,128], index: 7, kind: output, shape index: {0}]
  %s8 = inlined_call_operand.hbm [shape: f32[8,32], index: 8, kind: output, shape index: {1}]
  %9 = xla_tuple %s7, %s8
  %s10 = sld [smem:[#allocation0]]
  $region54: #{tpu_custom_call.1} parent=0
    _
  %s12 = ssub.s32 1, %s10
  %s13 = scalar_select 0, %s12, %s10
  $region1: #{tpu_custom_call.1} parent=0
    #allocation3 [shape = 'u8[4096]{0}', space=vmem, size = 0x1000, scoped, tag = 'output window, operand 0, single buffered']
    #allocation4 [shape = 's32[1]{0}', space=sflag, size = 0x4, scoped, tag = 'scoped memory for tpu_custom_call.1']
    #allocation5 [shape = 'u8[4096]{0}', space=vmem, size = 0x1000, scoped, tag = 'output window, operand 1, single buffered']
    #allocation6 [shape = 's32[1]{0}', space=sflag, size = 0x4, scoped, tag = 'scoped memory for tpu_custom_call.1']
    %14 = vsyncpa [#allocation4], 0
    %15 = vsyncpa [#allocation6], 0
    // Predicated region
    $region2: #{tpu_custom_call.1} parent=1 // pred_check
      _
    $region3: #{tpu_custom_call.1} parent=1 // pred_check_branch
      %17 = sbr.rel (0) target = $region5
    $region4: #{tpu_custom_call.1} parent=1 // pred_region
      _
    $region5: #{tpu_custom_call.1} parent=1 // pred_fallthru
      _
    // Predicated region
    $region6: #{tpu_custom_call.1} parent=1 // pred_check
      _
    $region7: #{tpu_custom_call.1} parent=1 // pred_check_branch
      %19 = sbr.rel (0) target = $region9
    $region8: #{tpu_custom_call.1} parent=1 // pred_region
      _
    $region9: #{tpu_custom_call.1} parent=1 // pred_fallthru
      _
    // Predicated region
    $region10: #{tpu_custom_call.1} parent=1 // pred_check
      _
    $region11: #{tpu_custom_call.1} parent=1 // pred_check_branch
      %21 = sbr.rel (0) target = $region13
    $region12: #{tpu_custom_call.1} parent=1 // pred_region
      _
    $region13: #{tpu_custom_call.1} parent=1 // pred_fallthru
      _
    // Predicated region
    $region14: #{tpu_custom_call.1} parent=1 // pred_check
      _
    $region15: #{tpu_custom_call.1} parent=1 // pred_check_branch
      %23 = sbr.rel (0) target = $region17
    $region16: #{tpu_custom_call.1} parent=1 // pred_region
      _
    $region17: #{tpu_custom_call.1} parent=1 // pred_fallthru
      _
    // Predicated region
    $region18: #{tpu_custom_call.1} parent=1 // pred_check
      _
    $region19: #{tpu_custom_call.1} parent=1 // pred_check_branch
      %25 = sbr.rel (0) target = $region21
    $region20: #{tpu_custom_call.1} parent=1 // pred_region
      _
    $region21: #{tpu_custom_call.1} parent=1 // pred_fallthru
      _
    // Predicated region
    $region22: #{tpu_custom_call.1} parent=1 // pred_check
      _
    $region23: #{tpu_custom_call.1} parent=1 // pred_check_branch
      %27 = sbr.rel (0) target = $region25
    $region24: #{tpu_custom_call.1} parent=1 // pred_region
      _
    $region25: #{tpu_custom_call.1} parent=1 // pred_fallthru
      _
    // Predicated region
    $region26: #{tpu_custom_call.1} parent=1 // pred_check
      _
    $region27: #{tpu_custom_call.1} parent=1 // pred_check_branch
      %29 = sbr.rel (0) target = $region29
    $region28: #{tpu_custom_call.1} parent=1 // pred_region
      _
    $region29: #{tpu_custom_call.1} parent=1 // pred_fallthru
      _
    %p30 = scmp.eq.s32.totalorder 0, 0
    // Predicated region
    $region30: #{tpu_custom_call.1} parent=1 // pred_check
      %p31 = pneg %p30
    $region31: #{tpu_custom_call.1} parent=1 // pred_check_branch
      %33 = sbr.rel (%p31) target = $region33
    $region32: #{tpu_custom_call.1} parent=1 // pred_region
      %v34 = vld [vmem:[%s1] sm:$0xff]
      %vm35 = vcmask 261120
      %36 = vst.msk [vmem:[#allocation2] sm:$0xff] %vm35, %v34
    $region33: #{tpu_custom_call.1} parent=1 // pred_fallthru
      _
    %v37 = vld [vmem:[%s3] sm:$0xff]
    %v38 = vld [vmem:[%s3 + $0x8] sm:$0xff]
    %v39 = vld [vmem:[%s3 + $0x10] sm:$0xff]
    %v40 = vld [vmem:[%s3 + $0x18] sm:$0xff]
    %v41 = vld [vmem:[%s5] sm:$0xff]
    %v42 = vld [vmem:[%s5 + $0x8] sm:$0xff]
    %v43 = vld [vmem:[%s5 + $0x10] sm:$0xff]
    %v44 = vld [vmem:[%s5 + $0x18] sm:$0xff]
    %v45 = vld [vmem:[%s5 + $0x20] sm:$0xff]
    %v46 = vld [vmem:[%s5 + $0x28] sm:$0xff]
    %v47 = vld [vmem:[%s6] sm:$0x1]
    %v49 = vperm.slane %v47, 0
    %v51 = vld [vmem:[%s0] sm:$0xff]
    %v52 = vld [vmem:[%s0 + $0x8] sm:$0xff]
    %v53 = vld [vmem:[%s0 + $0x10] sm:$0xff]
    %v54 = vld [vmem:[%s0 + $0x18] sm:$0xff]
    %v55 = vld [vmem:[%s0 + $0x20] sm:$0xff]
    %v56 = vld [vmem:[%s0 + $0x28] sm:$0xff]
    %v57 = vld [vmem:[%s0 + $0x30] sm:$0xff]
    %v58 = vld [vmem:[%s0 + $0x38] sm:$0xff]
    %v59 = vld [vmem:[%s2] sm:$0xff]
    %v60 = vld [vmem:[%s2 + $0x8] sm:$0xf]
    %v61 = vld [vmem:[%s4] sm:$0x1]
    %v63 = vperm.slane %v61, 0
    %vm65 = vcmask 97280
    %v67 = vsel %vm65, %v51, 0
    %v70 = vsel %vm65, %v52, 0
    %v73 = vsel %vm65, %v53, 0
    %v76 = vsel %vm65, %v54, 0
    %v79 = vsel %vm65, %v55, 0
    %v82 = vsel %vm65, %v56, 0
    %v85 = vsel %vm65, %v57, 0
    %v88 = vsel %vm65, %v58, 0
    %vm90 = vcmask 1043456
    %v92 = vsel %vm90, %v60, 0
    %94 = vmatpush.msra.mxu0 0.0
    %95 = vmatpush.msra.mxu0 0.0
    %96 = vmatpush.msra.mxu0 0.0
    %97 = vmatpush.msra.mxu0 0.0
    %98 = vmatpush.msra.mxu0 0.0
    %99 = vmatpush.msra.mxu0 0.0
    %100 = vmatpush.msra.mxu0 0.0
    %101 = vmatpush.msra.mxu0 0.0
    %102 = vmatpush.msra.mxu0 0.0
    %103 = vmatpush.msra.mxu0 0.0
    %104 = vmatpush.msra.mxu0 0.0
    %105 = vmatpush.msra.mxu0 0.0
    %106 = vmatpush.msra.mxu0 0.0
    %107 = vmatpush.msra.mxu0 0.0
    %108 = vmatpush.msra.mxu0 %v92
    %109 = vmatpush.msra.mxu0 %v59
    %110 = vmatmul.f32.gmra.mxu0 %v67
    %v111 = vpop.f32.mrf.mxu0
    %v112 = vadd.f32 %v63, %v111
    %113 = vmatmul.f32.gmra.mxu0 %v70
    %v114 = vpop.f32.mrf.mxu0
    %v115 = vadd.f32 %v63, %v114
    %116 = vmatmul.f32.gmra.mxu0 %v73
    %v117 = vpop.f32.mrf.mxu0
    %v118 = vadd.f32 %v63, %v117
    %119 = vmatmul.f32.gmra.mxu0 %v76
    %v120 = vpop.f32.mrf.mxu0
    %v121 = vadd.f32 %v63, %v120
    %122 = vmatmul.f32.gmra.mxu0 %v79
    %v123 = vpop.f32.mrf.mxu0
    %v124 = vadd.f32 %v63, %v123
    %125 = vmatmul.f32.gmra.mxu0 %v82
    %v126 = vpop.f32.mrf.mxu0
    %v127 = vadd.f32 %v63, %v126
    %128 = vmatmul.f32.gmra.mxu0 %v85
    %v129 = vpop.f32.mrf.mxu0
    %v130 = vadd.f32 %v63, %v129
    %131 = vmatmul.f32.gmra.mxu0 %v88
    %v132 = vpop.f32.mrf.mxu0
    %v133 = vadd.f32 %v63, %v132
    %134 = vdwg.mxu0
    %v135 = vld [vmem:[#allocation2] sm:$0xff]
    %vm136 = vcmask 261120
    %v138 = vsel %vm136, %v135, 0
    %140 = vmatpush.msra.mxu0 0.0
    %141 = vmatpush.msra.mxu0 0.0
    %142 = vmatpush.msra.mxu0 0.0
    %143 = vmatpush.msra.mxu0 0.0
    %144 = vmatpush.msra.mxu0 0.0
    %145 = vmatpush.msra.mxu0 0.0
    %146 = vmatpush.msra.mxu0 0.0
    %147 = vmatpush.msra.mxu0 0.0
    %148 = vmatpush.msra.mxu0 0.0
    %149 = vmatpush.msra.mxu0 0.0
    %150 = vmatpush.msra.mxu0 0.0
    %151 = vmatpush.msra.mxu0 0.0
    %152 = vmatpush.msra.mxu0 %v40
    %153 = vmatpush.msra.mxu0 %v39
    %154 = vmatpush.msra.mxu0 %v38
    %155 = vmatpush.msra.mxu0 %v37
    %156 = vmatmul.f32.gmra.mxu0 %v138
    %v157 = vpop.f32.mrf.mxu0
    %v158 = vadd.f32 0.0, %v157
    %159 = vdwg.mxu0
    %v160 = vadd.f32 %v112, %v158
    %vm161 = vcmask 392192
    %v163 = vsel %vm161, %v160, 0
    %165 = vmatpush.msra.mxu0 0.0
    %166 = vmatpush.msra.mxu0 0.0
    %167 = vmatpush.msra.mxu0 0.0
    %168 = vmatpush.msra.mxu0 0.0
    %169 = vmatpush.msra.mxu0 0.0
    %170 = vmatpush.msra.mxu0 0.0
    %171 = vmatpush.msra.mxu0 0.0
    %172 = vmatpush.msra.mxu0 0.0
    %173 = vmatpush.msra.mxu0 0.0
    %174 = vmatpush.msra.mxu0 0.0
    %175 = vmatpush.msra.mxu0 %v46
    %176 = vmatpush.msra.mxu0 %v45
    %177 = vmatpush.msra.mxu0 %v44
    %178 = vmatpush.msra.mxu0 %v43
    %179 = vmatpush.msra.mxu0 %v42
    %180 = vmatpush.msra.mxu0 %v41
    %181 = vmatmul.f32.gmra.mxu0 %v163
    %v182 = vpop.f32.mrf.mxu0
    %v183 = vadd.f32 %v49, %v182
    %184 = vdwg.mxu0
    %vm185 = vcmask 130048
    %v186 = vsel %vm185, %v183, -inf
    %187 = vmax.xlane.f32.xlu0 %v186
    %v188 = vpop.xlane.xlu0 %187
    %v189 = vsub.f32 %v183, %v188
    %v190 = vmul.f32 %v189, 1.442695
    %v191 = vpow.pop %v190
    %v192 = vsel %vm185, %v191, 0.0
    %193 = vadd.xlane.f32.xlu0 %v192
    %v194 = vpop.xlane.xlu0 %193
    %v195 = vlog2.pop %v194
    %v196 = vmul.f32 %v195, 0.6931472
    %v197 = vadd.f32 %v188, %v196
    %v198 = vsub.f32 %v183, %v197
    %199 = vst.msk [vmem:[#allocation3] sm:$0xff] %vm185, %v198
    %v200 = vsel %vm136, %v160, 0
    %202 = vmatpush.msra.mxu0 0.0
    %203 = vmatpush.msra.mxu0 0.0
    %204 = vmatpush.msra.mxu0 0.0
    %205 = vmatpush.msra.mxu0 0.0
    %206 = vmatpush.msra.mxu0 0.0
    %207 = vmatpush.msra.mxu0 0.0
    %208 = vmatpush.msra.mxu0 0.0
    %209 = vmatpush.msra.mxu0 0.0
    %210 = vmatpush.msra.mxu0 0.0
    %211 = vmatpush.msra.mxu0 0.0
    %212 = vmatpush.msra.mxu0 0.0
    %213 = vmatpush.msra.mxu0 0.0
    %214 = vmatpush.msra.mxu0 %v40
    %215 = vmatpush.msra.mxu0 %v39
    %216 = vmatpush.msra.mxu0 %v38
    %217 = vmatpush.msra.mxu0 %v37
    %218 = vmatmul.f32.gmra.mxu0 %v200
    %v219 = vpop.f32.mrf.mxu0
    %v220 = vadd.f32 0.0, %v219
    %221 = vdwg.mxu0
    %v222 = vadd.f32 %v115, %v220
    %v224 = vsel %vm161, %v222, 0
    %226 = vmatpush.msra.mxu0 0.0
    %227 = vmatpush.msra.mxu0 0.0
    %228 = vmatpush.msra.mxu0 0.0
    %229 = vmatpush.msra.mxu0 0.0
    %230 = vmatpush.msra.mxu0 0.0
    %231 = vmatpush.msra.mxu0 0.0
    %232 = vmatpush.msra.mxu0 0.0
    %233 = vmatpush.msra.mxu0 0.0
    %234 = vmatpush.msra.mxu0 0.0
    %235 = vmatpush.msra.mxu0 0.0
    %236 = vmatpush.msra.mxu0 %v46
    %237 = vmatpush.msra.mxu0 %v45
    %238 = vmatpush.msra.mxu0 %v44
    %239 = vmatpush.msra.mxu0 %v43
    %240 = vmatpush.msra.mxu0 %v42
    %241 = vmatpush.msra.mxu0 %v41
    %242 = vmatmul.f32.gmra.mxu0 %v224
    %v243 = vpop.f32.mrf.mxu0
    %v244 = vadd.f32 %v49, %v243
    %245 = vdwg.mxu0
    %v246 = vsel %vm185, %v244, -inf
    %247 = vmax.xlane.f32.xlu0 %v246
    %v248 = vpop.xlane.xlu0 %247
    %v249 = vsub.f32 %v244, %v248
    %v250 = vmul.f32 %v249, 1.442695
    %v251 = vpow.pop %v250
    %v252 = vsel %vm185, %v251, 0.0
    %253 = vadd.xlane.f32.xlu0 %v252
    %v254 = vpop.xlane.xlu0 %253
    %v255 = vlog2.pop %v254
    %v256 = vmul.f32 %v255, 0.6931472
    %v257 = vadd.f32 %v248, %v256
    %v258 = vsub.f32 %v244, %v257
    %260 = vrot.lane.b32.xlu0 %v258, 16
    %v261 = vpop.permute.xlu0 %260
    %vm263 = vcmask 261248
    %264 = vst.msk [vmem:[#allocation3] sm:$0xff] %vm263, %v261
    %v265 = vsel %vm136, %v222, 0
    %267 = vmatpush.msra.mxu0 0.0
    %268 = vmatpush.msra.mxu0 0.0
    %269 = vmatpush.msra.mxu0 0.0
    %270 = vmatpush.msra.mxu0 0.0
    %271 = vmatpush.msra.mxu0 0.0
    %272 = vmatpush.msra.mxu0 0.0
    %273 = vmatpush.msra.mxu0 0.0
    %274 = vmatpush.msra.mxu0 0.0
    %275 = vmatpush.msra.mxu0 0.0
    %276 = vmatpush.msra.mxu0 0.0
    %277 = vmatpush.msra.mxu0 0.0
    %278 = vmatpush.msra.mxu0 0.0
    %279 = vmatpush.msra.mxu0 %v40
    %280 = vmatpush.msra.mxu0 %v39
    %281 = vmatpush.msra.mxu0 %v38
    %282 = vmatpush.msra.mxu0 %v37
    %283 = vmatmul.f32.gmra.mxu0 %v265
    %v284 = vpop.f32.mrf.mxu0
    %v285 = vadd.f32 0.0, %v284
    %286 = vdwg.mxu0
    %v287 = vadd.f32 %v118, %v285
    %v289 = vsel %vm161, %v287, 0
    %291 = vmatpush.msra.mxu0 0.0
    %292 = vmatpush.msra.mxu0 0.0
    %293 = vmatpush.msra.mxu0 0.0
    %294 = vmatpush.msra.mxu0 0.0
    %295 = vmatpush.msra.mxu0 0.0
    %296 = vmatpush.msra.mxu0 0.0
    %297 = vmatpush.msra.mxu0 0.0
    %298 = vmatpush.msra.mxu0 0.0
    %299 = vmatpush.msra.mxu0 0.0
    %300 = vmatpush.msra.mxu0 0.0
    %301 = vmatpush.msra.mxu0 %v46
    %302 = vmatpush.msra.mxu0 %v45
    %303 = vmatpush.msra.mxu0 %v44
    %304 = vmatpush.msra.mxu0 %v43
    %305 = vmatpush.msra.mxu0 %v42
    %306 = vmatpush.msra.mxu0 %v41
    %307 = vmatmul.f32.gmra.mxu0 %v289
    %v308 = vpop.f32.mrf.mxu0
    %v309 = vadd.f32 %v49, %v308
    %310 = vdwg.mxu0
    %v311 = vsel %vm185, %v309, -inf
    %312 = vmax.xlane.f32.xlu0 %v311
    %v313 = vpop.xlane.xlu0 %312
    %v314 = vsub.f32 %v309, %v313
    %v315 = vmul.f32 %v314, 1.442695
    %v316 = vpow.pop %v315
    %v317 = vsel %vm185, %v316, 0.0
    %318 = vadd.xlane.f32.xlu0 %v317
    %v319 = vpop.xlane.xlu0 %318
    %v320 = vlog2.pop %v319
    %v321 = vmul.f32 %v320, 0.6931472
    %v322 = vadd.f32 %v313, %v321
    %v323 = vsub.f32 %v309, %v322
    %325 = vrot.lane.b32.xlu0 %v323, 32
    %v326 = vpop.permute.xlu0 %325
    %vm328 = vcmask 392448
    %329 = vst.msk [vmem:[#allocation3] sm:$0xff] %vm328, %v326
    %v330 = vsel %vm136, %v287, 0
    %332 = vmatpush.msra.mxu0 0.0
    %333 = vmatpush.msra.mxu0 0.0
    %334 = vmatpush.msra.mxu0 0.0
    %335 = vmatpush.msra.mxu0 0.0
    %336 = vmatpush.msra.mxu0 0.0
    %337 = vmatpush.msra.mxu0 0.0
    %338 = vmatpush.msra.mxu0 0.0
    %339 = vmatpush.msra.mxu0 0.0
    %340 = vmatpush.msra.mxu0 0.0
    %341 = vmatpush.msra.mxu0 0.0
    %342 = vmatpush.msra.mxu0 0.0
    %343 = vmatpush.msra.mxu0 0.0
    %344 = vmatpush.msra.mxu0 %v40
    %345 = vmatpush.msra.mxu0 %v39
    %346 = vmatpush.msra.mxu0 %v38
    %347 = vmatpush.msra.mxu0 %v37
    %348 = vmatmul.f32.gmra.mxu0 %v330
    %v349 = vpop.f32.mrf.mxu0
    %v350 = vadd.f32 0.0, %v349
    %351 = vdwg.mxu0
    %v352 = vadd.f32 %v121, %v350
    %v354 = vsel %vm161, %v352, 0
    %356 = vmatpush.msra.mxu0 0.0
    %357 = vmatpush.msra.mxu0 0.0
    %358 = vmatpush.msra.mxu0 0.0
    %359 = vmatpush.msra.mxu0 0.0
    %360 = vmatpush.msra.mxu0 0.0
    %361 = vmatpush.msra.mxu0 0.0
    %362 = vmatpush.msra.mxu0 0.0
    %363 = vmatpush.msra.mxu0 0.0
    %364 = vmatpush.msra.mxu0 0.0
    %365 = vmatpush.msra.mxu0 0.0
    %366 = vmatpush.msra.mxu0 %v46
    %367 = vmatpush.msra.mxu0 %v45
    %368 = vmatpush.msra.mxu0 %v44
    %369 = vmatpush.msra.mxu0 %v43
    %370 = vmatpush.msra.mxu0 %v42
    %371 = vmatpush.msra.mxu0 %v41
    %372 = vmatmul.f32.gmra.mxu0 %v354
    %v373 = vpop.f32.mrf.mxu0
    %v374 = vadd.f32 %v49, %v373
    %375 = vdwg.mxu0
    %v376 = vsel %vm185, %v374, -inf
    %377 = vmax.xlane.f32.xlu0 %v376
    %v378 = vpop.xlane.xlu0 %377
    %v379 = vsub.f32 %v374, %v378
    %v380 = vmul.f32 %v379, 1.442695
    %v381 = vpow.pop %v380
    %v382 = vsel %vm185, %v381, 0.0
    %383 = vadd.xlane.f32.xlu0 %v382
    %v384 = vpop.xlane.xlu0 %383
    %v385 = vlog2.pop %v384
    %v386 = vmul.f32 %v385, 0.6931472
    %v387 = vadd.f32 %v378, %v386
    %v388 = vsub.f32 %v374, %v387
    %390 = vrot.lane.b32.xlu0 %v388, 48
    %v391 = vpop.permute.xlu0 %390
    %vm393 = vcmask 523648
    %394 = vst.msk [vmem:[#allocation3] sm:$0xff] %vm393, %v391
    %v395 = vsel %vm136, %v352, 0
    %397 = vmatpush.msra.mxu0 0.0
    %398 = vmatpush.msra.mxu0 0.0
    %399 = vmatpush.msra.mxu0 0.0
    %400 = vmatpush.msra.mxu0 0.0
    %401 = vmatpush.msra.mxu0 0.0
    %402 = vmatpush.msra.mxu0 0.0
    %403 = vmatpush.msra.mxu0 0.0
    %404 = vmatpush.msra.mxu0 0.0
    %405 = vmatpush.msra.mxu0 0.0
    %406 = vmatpush.msra.mxu0 0.0
    %407 = vmatpush.msra.mxu0 0.0
    %408 = vmatpush.msra.mxu0 0.0
    %409 = vmatpush.msra.mxu0 %v40
    %410 = vmatpush.msra.mxu0 %v39
    %411 = vmatpush.msra.mxu0 %v38
    %412 = vmatpush.msra.mxu0 %v37
    %413 = vmatmul.f32.gmra.mxu0 %v395
    %v414 = vpop.f32.mrf.mxu0
    %v415 = vadd.f32 0.0, %v414
    %416 = vdwg.mxu0
    %v417 = vadd.f32 %v124, %v415
    %v419 = vsel %vm161, %v417, 0
    %421 = vmatpush.msra.mxu0 0.0
    %422 = vmatpush.msra.mxu0 0.0
    %423 = vmatpush.msra.mxu0 0.0
    %424 = vmatpush.msra.mxu0 0.0
    %425 = vmatpush.msra.mxu0 0.0
    %426 = vmatpush.msra.mxu0 0.0
    %427 = vmatpush.msra.mxu0 0.0
    %428 = vmatpush.msra.mxu0 0.0
    %429 = vmatpush.msra.mxu0 0.0
    %430 = vmatpush.msra.mxu0 0.0
    %431 = vmatpush.msra.mxu0 %v46
    %432 = vmatpush.msra.mxu0 %v45
    %433 = vmatpush.msra.mxu0 %v44
    %434 = vmatpush.msra.mxu0 %v43
    %435 = vmatpush.msra.mxu0 %v42
    %436 = vmatpush.msra.mxu0 %v41
    %437 = vmatmul.f32.gmra.mxu0 %v419
    %v438 = vpop.f32.mrf.mxu0
    %v439 = vadd.f32 %v49, %v438
    %440 = vdwg.mxu0
    %v441 = vsel %vm185, %v439, -inf
    %442 = vmax.xlane.f32.xlu0 %v441
    %v443 = vpop.xlane.xlu0 %442
    %v444 = vsub.f32 %v439, %v443
    %v445 = vmul.f32 %v444, 1.442695
    %v446 = vpow.pop %v445
    %v447 = vsel %vm185, %v446, 0.0
    %448 = vadd.xlane.f32.xlu0 %v447
    %v449 = vpop.xlane.xlu0 %448
    %v450 = vlog2.pop %v449
    %v451 = vmul.f32 %v450, 0.6931472
    %v452 = vadd.f32 %v443, %v451
    %v453 = vsub.f32 %v439, %v452
    %455 = vrot.lane.b32.xlu0 %v453, 64
    %v456 = vpop.permute.xlu0 %455
    %vm458 = vcmask 654848
    %459 = vst.msk [vmem:[#allocation3] sm:$0xff] %vm458, %v456
    %v460 = vsel %vm136, %v417, 0
    %462 = vmatpush.msra.mxu0 0.0
    %463 = vmatpush.msra.mxu0 0.0
    %464 = vmatpush.msra.mxu0 0.0
    %465 = vmatpush.msra.mxu0 0.0
    %466 = vmatpush.msra.mxu0 0.0
    %467 = vmatpush.msra.mxu0 0.0
    %468 = vmatpush.msra.mxu0 0.0
    %469 = vmatpush.msra.mxu0 0.0
    %470 = vmatpush.msra.mxu0 0.0
    %471 = vmatpush.msra.mxu0 0.0
    %472 = vmatpush.msra.mxu0 0.0
    %473 = vmatpush.msra.mxu0 0.0
    %474 = vmatpush.msra.mxu0 %v40
    %475 = vmatpush.msra.mxu0 %v39
    %476 = vmatpush.msra.mxu0 %v38
    %477 = vmatpush.msra.mxu0 %v37
    %478 = vmatmul.f32.gmra.mxu0 %v460
    %v479 = vpop.f32.mrf.mxu0
    %v480 = vadd.f32 0.0, %v479
    %481 = vdwg.mxu0
    %v482 = vadd.f32 %v127, %v480
    %v484 = vsel %vm161, %v482, 0
    %486 = vmatpush.msra.mxu0 0.0
    %487 = vmatpush.msra.mxu0 0.0
    %488 = vmatpush.msra.mxu0 0.0
    %489 = vmatpush.msra.mxu0 0.0
    %490 = vmatpush.msra.mxu0 0.0
    %491 = vmatpush.msra.mxu0 0.0
    %492 = vmatpush.msra.mxu0 0.0
    %493 = vmatpush.msra.mxu0 0.0
    %494 = vmatpush.msra.mxu0 0.0
    %495 = vmatpush.msra.mxu0 0.0
    %496 = vmatpush.msra.mxu0 %v46
    %497 = vmatpush.msra.mxu0 %v45
    %498 = vmatpush.msra.mxu0 %v44
    %499 = vmatpush.msra.mxu0 %v43
    %500 = vmatpush.msra.mxu0 %v42
    %501 = vmatpush.msra.mxu0 %v41
    %502 = vmatmul.f32.gmra.mxu0 %v484
    %v503 = vpop.f32.mrf.mxu0
    %v504 = vadd.f32 %v49, %v503
    %505 = vdwg.mxu0
    %v506 = vsel %vm185, %v504, -inf
    %507 = vmax.xlane.f32.xlu0 %v506
    %v508 = vpop.xlane.xlu0 %507
    %v509 = vsub.f32 %v504, %v508
    %v510 = vmul.f32 %v509, 1.442695
    %v511 = vpow.pop %v510
    %v512 = vsel %vm185, %v511, 0.0
    %513 = vadd.xlane.f32.xlu0 %v512
    %v514 = vpop.xlane.xlu0 %513
    %v515 = vlog2.pop %v514
    %v516 = vmul.f32 %v515, 0.6931472
    %v517 = vadd.f32 %v508, %v516
    %v518 = vsub.f32 %v504, %v517
    %520 = vrot.lane.b32.xlu0 %v518, 80
    %v521 = vpop.permute.xlu0 %520
    %vm523 = vcmask 786048
    %524 = vst.msk [vmem:[#allocation3] sm:$0xff] %vm523, %v521
    %v525 = vsel %vm136, %v482, 0
    %527 = vmatpush.msra.mxu0 0.0
    %528 = vmatpush.msra.mxu0 0.0
    %529 = vmatpush.msra.mxu0 0.0
    %530 = vmatpush.msra.mxu0 0.0
    %531 = vmatpush.msra.mxu0 0.0
    %532 = vmatpush.msra.mxu0 0.0
    %533 = vmatpush.msra.mxu0 0.0
    %534 = vmatpush.msra.mxu0 0.0
    %535 = vmatpush.msra.mxu0 0.0
    %536 = vmatpush.msra.mxu0 0.0
    %537 = vmatpush.msra.mxu0 0.0
    %538 = vmatpush.msra.mxu0 0.0
    %539 = vmatpush.msra.mxu0 %v40
    %540 = vmatpush.msra.mxu0 %v39
    %541 = vmatpush.msra.mxu0 %v38
    %542 = vmatpush.msra.mxu0 %v37
    %543 = vmatmul.f32.gmra.mxu0 %v525
    %v544 = vpop.f32.mrf.mxu0
    %v545 = vadd.f32 0.0, %v544
    %546 = vdwg.mxu0
    %v547 = vadd.f32 %v130, %v545
    %v549 = vsel %vm161, %v547, 0
    %551 = vmatpush.msra.mxu0 0.0
    %552 = vmatpush.msra.mxu0 0.0
    %553 = vmatpush.msra.mxu0 0.0
    %554 = vmatpush.msra.mxu0 0.0
    %555 = vmatpush.msra.mxu0 0.0
    %556 = vmatpush.msra.mxu0 0.0
    %557 = vmatpush.msra.mxu0 0.0
    %558 = vmatpush.msra.mxu0 0.0
    %559 = vmatpush.msra.mxu0 0.0
    %560 = vmatpush.msra.mxu0 0.0
    %561 = vmatpush.msra.mxu0 %v46
    %562 = vmatpush.msra.mxu0 %v45
    %563 = vmatpush.msra.mxu0 %v44
    %564 = vmatpush.msra.mxu0 %v43
    %565 = vmatpush.msra.mxu0 %v42
    %566 = vmatpush.msra.mxu0 %v41
    %567 = vmatmul.f32.gmra.mxu0 %v549
    %v568 = vpop.f32.mrf.mxu0
    %v569 = vadd.f32 %v49, %v568
    %570 = vdwg.mxu0
    %v571 = vsel %vm185, %v569, -inf
    %572 = vmax.xlane.f32.xlu0 %v571
    %v573 = vpop.xlane.xlu0 %572
    %v574 = vsub.f32 %v569, %v573
    %v575 = vmul.f32 %v574, 1.442695
    %v576 = vpow.pop %v575
    %v577 = vsel %vm185, %v576, 0.0
    %578 = vadd.xlane.f32.xlu0 %v577
    %v579 = vpop.xlane.xlu0 %578
    %v580 = vlog2.pop %v579
    %v581 = vmul.f32 %v580, 0.6931472
    %v582 = vadd.f32 %v573, %v581
    %v583 = vsub.f32 %v569, %v582
    %585 = vrot.lane.b32.xlu0 %v583, 96
    %v586 = vpop.permute.xlu0 %585
    %vm588 = vcmask 917248
    %589 = vst.msk [vmem:[#allocation3] sm:$0xff] %vm588, %v586
    %v590 = vsel %vm136, %v547, 0
    %592 = vmatpush.msra.mxu0 0.0
    %593 = vmatpush.msra.mxu0 0.0
    %594 = vmatpush.msra.mxu0 0.0
    %595 = vmatpush.msra.mxu0 0.0
    %596 = vmatpush.msra.mxu0 0.0
    %597 = vmatpush.msra.mxu0 0.0
    %598 = vmatpush.msra.mxu0 0.0
    %599 = vmatpush.msra.mxu0 0.0
    %600 = vmatpush.msra.mxu0 0.0
    %601 = vmatpush.msra.mxu0 0.0
    %602 = vmatpush.msra.mxu0 0.0
    %603 = vmatpush.msra.mxu0 0.0
    %604 = vmatpush.msra.mxu0 %v40
    %605 = vmatpush.msra.mxu0 %v39
    %606 = vmatpush.msra.mxu0 %v38
    %607 = vmatpush.msra.mxu0 %v37
    %608 = vmatmul.f32.gmra.mxu0 %v590
    %v609 = vpop.f32.mrf.mxu0
    %v610 = vadd.f32 0.0, %v609
    %611 = vdwg.mxu0
    %v612 = vadd.f32 %v133, %v610
    %v614 = vsel %vm161, %v612, 0
    %616 = vmatpush.msra.mxu0 0.0
    %617 = vmatpush.msra.mxu0 0.0
    %618 = vmatpush.msra.mxu0 0.0
    %619 = vmatpush.msra.mxu0 0.0
    %620 = vmatpush.msra.mxu0 0.0
    %621 = vmatpush.msra.mxu0 0.0
    %622 = vmatpush.msra.mxu0 0.0
    %623 = vmatpush.msra.mxu0 0.0
    %624 = vmatpush.msra.mxu0 0.0
    %625 = vmatpush.msra.mxu0 0.0
    %626 = vmatpush.msra.mxu0 %v46
    %627 = vmatpush.msra.mxu0 %v45
    %628 = vmatpush.msra.mxu0 %v44
    %629 = vmatpush.msra.mxu0 %v43
    %630 = vmatpush.msra.mxu0 %v42
    %631 = vmatpush.msra.mxu0 %v41
    %632 = vmatmul.f32.gmra.mxu0 %v614
    %v633 = vpop.f32.mrf.mxu0
    %v634 = vadd.f32 %v49, %v633
    %635 = vdwg.mxu0
    %v636 = vsel %vm185, %v634, -inf
    %637 = vmax.xlane.f32.xlu0 %v636
    %v638 = vpop.xlane.xlu0 %637
    %v639 = vsub.f32 %v634, %v638
    %v640 = vmul.f32 %v639, 1.442695
    %v641 = vpow.pop %v640
    %v642 = vsel %vm185, %v641, 0.0
    %643 = vadd.xlane.f32.xlu0 %v642
    %v644 = vpop.xlane.xlu0 %643
    %v645 = vlog2.pop %v644
    %v646 = vmul.f32 %v645, 0.6931472
    %v647 = vadd.f32 %v638, %v646
    %v648 = vsub.f32 %v634, %v647
    %650 = vrot.lane.b32.xlu0 %v648, 112
    %v651 = vpop.permute.xlu0 %650
    %vm653 = vcmask 1048448
    %654 = vst.msk [vmem:[#allocation3] sm:$0xff] %vm653, %v651
    %655 = vst.msk [vmem:[#allocation2] sm:$0xff] %vm136, %v612
    // Predicated region
    $region34: #{tpu_custom_call.1} parent=1 // pred_check
      %p656 = pneg %p30
    $region35: #{tpu_custom_call.1} parent=1 // pred_check_branch
      %658 = sbr.rel (%p656) target = $region37
    $region36: #{tpu_custom_call.1} parent=1 // pred_region
      %659 = vst.msk [vmem:[#allocation5] sm:$0xff] %vm136, %v612
    $region37: #{tpu_custom_call.1} parent=1 // pred_fallthru
      _
    // Predicated region
    $region38: #{tpu_custom_call.1} parent=1 // pred_check
      _
    $region39: #{tpu_custom_call.1} parent=1 // pred_check_branch
      %661 = sbr.rel (0) target = $region41
    $region40: #{tpu_custom_call.1} parent=1 // pred_region
      %663 = vsyncadd [#allocation4], 0
      %s665 = sshll.u32 [#allocation3], 4
      %s666 = int_to_ptr.vmem [resolvable:$true] %s665
      %s667 = sshll.u32 %s7, 4
      %s668 = int_to_ptr.hbm [resolvable:$true] %s667
      %670 = dma.vmem_to_hbm [thread:$0]  %s666, 128, %s668, [#allocation4]
    $region41: #{tpu_custom_call.1} parent=1 // pred_fallthru
      _
    // Predicated region
    $region42: #{tpu_custom_call.1} parent=1 // pred_check
      _
    $region43: #{tpu_custom_call.1} parent=1 // pred_check_branch
      %672 = sbr.rel (0) target = $region45
    $region44: #{tpu_custom_call.1} parent=1 // pred_region
      %674 = vsyncadd [#allocation6], 0
      %s676 = sshll.u32 [#allocation5], 4
      %s677 = int_to_ptr.vmem [resolvable:$true] %s676
      %s678 = sshll.u32 %s8, 4
      %s679 = int_to_ptr.hbm [resolvable:$true] %s678
      %681 = dma.vmem_to_hbm [thread:$0]  %s677, 128, %s679, [#allocation6]
    $region45: #{tpu_custom_call.1} parent=1 // pred_fallthru
      _
    // Predicated region
    $region46: #{tpu_custom_call.1} parent=1 // pred_check
      _
    $region47: #{tpu_custom_call.1} parent=1 // pred_check_branch
      %683 = sbr.rel (0) target = $region49
    $region48: #{tpu_custom_call.1} parent=1 // pred_region
      %685 = dma.done [#allocation4], 128
    $region49: #{tpu_custom_call.1} parent=1 // pred_fallthru
      _
    // Predicated region
    $region50: #{tpu_custom_call.1} parent=1 // pred_check
      _
    $region51: #{tpu_custom_call.1} parent=1 // pred_check_branch
      %687 = sbr.rel (0) target = $region53
    $region52: #{tpu_custom_call.1} parent=1 // pred_region
      %689 = dma.done [#allocation6], 128
    $region53: #{tpu_custom_call.1} parent=1 // pred_fallthru
      _
    %690 = vsyncpa [#allocation4], 1
    %691 = vsyncpa [#allocation6], 1

</llo_original>
